<compile_context>
chip_gen: v7x
topology: tpu7x:2x2x1
jax: 0.10.0
libtpu: 0.0.40
codegen_flags: <defaults>
</compile_context>

<pallas_src>
import functools

import numpy as np
import jax
import jax.numpy as jnp
from jax.experimental import pallas as pl
from jax.experimental.pallas import tpu as pltpu

# ----------------------------- configuration (small, consistent shapes) -----
INPUT_DIM = 12       # real model: 99
OBJ_INPUT_DIM = 9
HAND_SHAPE_DIM = 10
OBJ_EMBED_DIM = 16   # real model: 768
CLIP_DIM = 16        # real model: 512
LATENT_DIM = 32      # real model: 256
FF_SIZE = 64         # real model: 1024
NUM_LAYERS = 2       # real model: 8
NUM_HEADS = 4
MAX_LEN = 64         # positional-encoding table length (real model: 5000)
OUT_PAD = 128        # lane-dense padding for the final projection
PAD16 = 16           # sublane-friendly padding for tiny contracting dims

assert LATENT_DIM % NUM_HEADS == 0

_F32_MAX = float(np.finfo(np.float32).max)


# ----------------------------- small helpers --------------------------------
def _full_spec(shape):
    """BlockSpec covering the whole array (constant index_map, any grid arity)."""
    return pl.BlockSpec(shape, lambda *_, _n=len(shape): (0,) * _n)


def _nan_to_num(x):
    # torch.nan_to_num semantics: NaN -> 0, +/-inf -> +/-float32 max.
    x = jnp.where(jnp.isnan(x), jnp.float32(0.0), x)
    return jnp.clip(x, -_F32_MAX, _F32_MAX)


def _silu(h):
    # exact SiLU (f32); approx reciprocal avoided for reference fidelity
    return h * (1.0 / (1.0 + jnp.exp(-h)))


def _gelu_tanh(x):
    # TODO(synk): PyTorch 'gelu' in TransformerEncoderLayer is exact erf-GELU;
    # tanh approximation used since erf lowering is not guaranteed in Mosaic.
    c = 0.7978845608028654  # sqrt(2/pi)
    return 0.5 * x * (1.0 + jnp.tanh(c * (x + 0.044715 * x * x * x)))


def _layer_norm(x, w, b, eps=1e-5):
    mu = jnp.mean(x, axis=-1, keepdims=True)
    var = jnp.mean(jnp.square(x - mu), axis=-1, keepdims=True)
    return (x - mu) * jax.lax.rsqrt(var + eps) * w + b


# ----------------------------- kernel 1: fused condition embeddings ---------
def _cond_embed_kernel(t_ref, text_ref, hside_ref, shape_ref, obja_ref,
                       tw1_ref, tb1_ref, tw2_ref, tb2_ref,
                       txw_ref, txb_ref, shw_ref, shb_ref, obw_ref, obb_ref,
                       o_ref):
    """All five condition embeddings in one launch -> (5, B, D)."""
    bf16 = jnp.bfloat16
    f32 = jnp.float32

    # TimestepEmbedder: Linear -> SiLU -> Linear
    h = jnp.dot(t_ref[...].astype(bf16), tw1_ref[...],
                preferred_element_type=f32) + tb1_ref[...]
    h = _silu(h)
    e0 = jnp.dot(h.astype(bf16), tw2_ref[...],
                 preferred_element_type=f32) + tb2_ref[...]
    # embed_text (mask_cond is identity in eval with cond_mask_prob=0)
    e1 = jnp.dot(text_ref[...].astype(bf16), txw_ref[...],
                 preferred_element_type=f32) + txb_ref[...]
    # HandsideProcess (buffer lookup already resolved on host)
    e2 = hside_ref[...]
    # HandShapeProcess (shape already mean-reduced and padded to 16 on host)
    e3 = jnp.dot(shape_ref[...].astype(bf16), shw_ref[...],
                 preferred_element_type=f32) + shb_ref[...]
    # ObjectEmbedProcess (object embeddings already mean-reduced on host)
    e4 = jnp.dot(obja_ref[...].astype(bf16), obw_ref[...],
                 preferred_element_type=f32) + obb_ref[...]

    # torch.nan_to_num(emb) fused here (no extra HBM pass in the wrapper)
    o_ref[0] = _nan_to_num(e0)
    o_ref[1] = _nan_to_num(e1)
    o_ref[2] = _nan_to_num(e2)
    o_ref[3] = _nan_to_num(e3)
    o_ref[4] = _nan_to_num(e4)


def pallas_cond_embed(p, t_in, text_feat, hside, shape_avg, obj_avg):
    B = t_in.shape[0]
    D = LATENT_DIM
    return pl.pallas_call(
        _cond_embed_kernel,
        out_shape=jax.ShapeDtypeStruct((5, B, D), jnp.float32),
        grid=(1,),
        in_specs=[
            _full_spec((B, D)), _full_spec((B, CLIP_DIM)), _full_spec((B, D)),
            _full_spec((B, PAD16)), _full_spec((B, OBJ_EMBED_DIM)),
            _full_spec((D, D)), _full_spec((1, D)),
            _full_spec((D, D)), _full_spec((1, D)),
            _full_spec((CLIP_DIM, D)), _full_spec((1, D)),
            _full_spec((PAD16, D)), _full_spec((1, D)),
            _full_spec((OBJ_EMBED_DIM, D)), _full_spec((1, D)),
        ],
        out_specs=_full_spec((5, B, D)),
    )(t_in, text_feat, hside, shape_avg, obj_avg,
      p["time_w1"], p["time_b1"], p["time_w2"], p["time_b2"],
      p["text_w"], p["text_b"], p["shape_w"], p["shape_b"],
      p["objemb_w"], p["objemb_b"])


# ----------------------------- kernel 2: fused MDM core ---------------------
def _mdm_core_kernel(num_heads, prefix,
                     emb_ref, hand_ref, obj_ref, pe_ref,
                     mwh_ref, mwo_ref, mbm_ref, mw2_ref, mb2_ref,
                     wqkv_ref, bqkv_ref, wout_ref, bout_ref,
                     ln1w_ref, ln1b_ref,
                     ffw1_ref, ffb1_ref, ffw2_ref, ffb2_ref,
                     ln2w_ref, ln2b_ref,
                     finw_ref, finb_ref,
                     out_ref, act_ref):
    """grid = (B, L).  Post-LN TransformerEncoder layer `l` for batch elem `b`.

    The (S, D) activation lives in `act_ref` (VMEM scratch, resident across the
    inner "arbitrary" layer axis).  It is built at l==0 (input merge + prefix +
    positional encoding) and the lane-padded output projection is applied at
    l == L-1.
    """
    bf16 = jnp.bfloat16
    f32 = jnp.float32
    l = pl.program_id(1)
    S, D = act_ref.shape
    H = num_heads
    Dh = D // H
    P = prefix

    # ---- l == 0: build the sequence for this batch element --------------------
    @pl.when(l == 0)
    def _build_sequence():
        # Folded InputProcess / ObjectInputProcess + input_merge MLP
        h = (jnp.dot(hand_ref[0].astype(bf16), mwh_ref[...],
                     preferred_element_type=f32)
             + jnp.dot(obj_ref[0].astype(bf16), mwo_ref[...],
                       preferred_element_type=f32)
             + mbm_ref[...])
        h = _silu(h)
        xm = jnp.dot(h.astype(bf16), mw2_ref[...],
                     preferred_element_type=f32) + mb2_ref[...]
        xm = _nan_to_num(xm)                               # torch.nan_to_num(x)
        # [emb ; x] concat + positional encoding, fused (never touches HBM)
        act_ref[...] = jnp.concatenate([emb_ref[0], xm], axis=0) + pe_ref[...]

    # ---- one encoder layer -----------------------------------------------------
    x = act_ref[...]                                       # (S, D) f32

    # self-attention: fused QKV projection (1/sqrt(Dh) folded into Wq at init)
    qkv = jnp.dot(x.astype(bf16), wqkv_ref[0],
                  preferred_element_type=f32) + bqkv_ref[0]          # (S, 3D)
    q = qkv[:, 0 * D:1 * D]
    k = qkv[:, 1 * D:2 * D]
    v = qkv[:, 2 * D:3 * D]

    # head-batched attention: one dot_general with H as batch dim (no per-head
    # Python loop, no concat, K relayout happens once per layer).
    qh = jnp.transpose(q.reshape(S, H, Dh), (1, 0, 2)).astype(bf16)  # (H,S,Dh)
    kh = jnp.transpose(k.reshape(S, H, Dh), (1, 0, 2)).astype(bf16)
    vh = jnp.transpose(v.reshape(S, H, Dh), (1, 0, 2)).astype(bf16)
    # TODO(synk): KV-tile (flash-style) for long S instead of full (H,S,S) scores.
    s = jnp.einsum('hqd,hkd->hqk', qh, kh, preferred_element_type=f32)
    s = s - jnp.max(s, axis=-1, keepdims=True)
    pmat = jnp.exp(s)
    pmat = pmat / jnp.sum(pmat, axis=-1, keepdims=True)              # exact div
    ctx = jnp.einsum('hqk,hkd->hqd', pmat.astype(bf16), vh,
                     preferred_element_type=f32)                     # (H,S,Dh)
    ctx = jnp.transpose(ctx, (1, 0, 2)).reshape(S, D)
    attn = jnp.dot(ctx.astype(bf16), wout_ref[0],
                   preferred_element_type=f32) + bout_ref[0]

    # residual + LayerNorm 1 (post-LN, f32)
    x1 = _layer_norm(x + attn, ln1w_ref[0], ln1b_ref[0])

    # feed-forward (GELU) + residual + LayerNorm 2
    h1 = jnp.dot(x1.astype(bf16), ffw1_ref[0],
                 preferred_element_type=f32) + ffb1_ref[0]
    h1 = _gelu_tanh(h1)
    ff = jnp.dot(h1.astype(bf16), ffw2_ref[0],
                 preferred_element_type=f32) + ffb2_ref[0]
    x2 = _layer_norm(x1 + ff, ln2w_ref[0], ln2b_ref[0])
    act_ref[...] = x2

    # ---- last layer: fused OutputProcess (lane-padded, lane-dense store) -------
    @pl.when(l == pl.num_programs(1) - 1)
    def _finalize():
        y = jnp.dot(x2[P:, :].astype(bf16), finw_ref[...],
                    preferred_element_type=f32) + finb_ref[...]      # (T, 128)
        out_ref[0] = _nan_to_num(y)                       # torch.nan_to_num(out)


def pallas_mdm_core(p, emb, hand, obj, pe_s,
                    num_layers=NUM_LAYERS, num_heads=NUM_HEADS):
    """emb (B,P,D), hand/obj (B,T,16), pe_s (S,D)  ->  (B, T, OUT_PAD)."""
    B, P, D = emb.shape
    T = hand.shape[1]
    S = P + T
    L = num_layers
    enc = p["enc"]
    F = enc["w1"].shape[-1]

    def batch_spec(shape):   # per-batch-element 3D arrays
        return pl.BlockSpec((1,) + tuple(shape[1:]), lambda b, l: (b, 0, 0))

    def layer_spec(shape):   # per-layer stacked weights (pipelined over l)
        return pl.BlockSpec((1,) + tuple(shape[1:]), lambda b, l: (l, 0, 0))

    def const2(shape):       # small 2D arrays, constant across the grid
        return pl.BlockSpec(tuple(shape), lambda b, l: (0, 0))

    kernel = functools.partial(_mdm_core_kernel, num_heads, P)
    return pl.pallas_call(
        kernel,
        out_shape=jax.ShapeDtypeStruct((B, T, OUT_PAD), jnp.float32),
        grid=(B, L),
        in_specs=[
            batch_spec((B, P, D)),
            batch_spec((B, T, PAD16)),
            batch_spec((B, T, PAD16)),
            const2((S, D)),
            const2((PAD16, D)), const2((PAD16, D)), const2((1, D)),
            const2((D, D)), const2((1, D)),
            layer_spec((L, D, 3 * D)), layer_spec((L, 1, 3 * D)),
            layer_spec((L, D, D)), layer_spec((L, 1, D)),
            layer_spec((L, 1, D)), layer_spec((L, 1, D)),
            layer_spec((L, D, F)), layer_spec((L, 1, F)),
            layer_spec((L, F, D)), layer_spec((L, 1, D)),
            layer_spec((L, 1, D)), layer_spec((L, 1, D)),
            const2((D, OUT_PAD)), const2((1, OUT_PAD)),
        ],
        out_specs=pl.BlockSpec((1, T, OUT_PAD), lambda b, l: (b, 0, 0)),
        scratch_shapes=[pltpu.VMEM((S, D), jnp.float32)],
        # b is "parallel" (megacore); l is the resident/accumulator axis.
        # NOTE: with small B each core re-fetches the layer weights -- accepted.
        compiler_params=pltpu.CompilerParams(
            dimension_semantics=("parallel", "arbitrary")),
    )(emb, hand, obj, pe_s,
      p["merge_wh"], p["merge_wo"], p["merge_bm"], p["merge_w2"], p["merge_b2"],
      enc["wqkv"], enc["bqkv"], enc["wo"], enc["bo"],
      enc["ln1w"], enc["ln1b"], enc["w1"], enc["b1"], enc["w2"], enc["b2"],
      enc["ln2w"], enc["ln2b"],
      p["final_w"], p["final_b"])


# ----------------------------- parameters / buffers --------------------------
def make_pe(max_len, d_model):
    position = np.arange(max_len, dtype=np.float32)[:, None]
    div_term = np.exp(np.arange(0, d_model, 2, dtype=np.float32)
                      * (-np.log(10000.0) / d_model))
    pe = np.zeros((max_len, d_model), np.float32)
    pe[:, 0::2] = np.sin(position * div_term)
    pe[:, 1::2] = np.cos(position * div_term)
    return jnp.asarray(pe)[:, None, :]        # (max_len, 1, d_model)


def init_params(key):
    D, F, H, L = LATENT_DIM, FF_SIZE, NUM_HEADS, NUM_LAYERS
    Dh = D // H
    bf16 = jnp.bfloat16
    keys = iter(jax.random.split(key, 64))

    def wf32(shape, fan_in):
        return jax.random.normal(next(keys), shape, jnp.float32) * (1.0 / np.sqrt(fan_in))

    def pad_rows(w, rows):
        return jnp.zeros((rows, w.shape[1]), w.dtype).at[:w.shape[0]].set(w)

    zD = jnp.zeros((1, D), jnp.float32)
    params = {"pe": make_pe(MAX_LEN, D)}

    # TimestepEmbedder.time_embed (Linear, SiLU, Linear)
    params["time_w1"] = wf32((D, D), D).astype(bf16); params["time_b1"] = zD
    params["time_w2"] = wf32((D, D), D).astype(bf16); params["time_b2"] = zD
    # embed_text
    params["text_w"] = wf32((CLIP_DIM, D), CLIP_DIM).astype(bf16); params["text_b"] = zD
    # HandShapeProcess.shape_embed (contracting dim padded 10 -> 16)
    params["shape_w"] = pad_rows(wf32((HAND_SHAPE_DIM, D), HAND_SHAPE_DIM), PAD16).astype(bf16)
    params["shape_b"] = zD
    # ObjectEmbedProcess.embedding
    params["objemb_w"] = wf32((OBJ_EMBED_DIM, D), OBJ_EMBED_DIM).astype(bf16)
    params["objemb_b"] = zD

    # InputProcess / ObjectInputProcess / input_merge, algebraically folded:
    #   merged @ W1 + b1 = hand @ (pose_w @ W1_top) + obj_mean @ (objpose_w @ W1_bot)
    #                      + (pose_b @ W1_top + objpose_b @ W1_bot + b1)
    # (contracting dims padded 12/9 -> 16 to avoid sublane relayouts)
    pose_w = wf32((INPUT_DIM, D), INPUT_DIM); pose_b = jnp.zeros((D,), jnp.float32)
    objpose_w = wf32((OBJ_INPUT_DIM, D), OBJ_INPUT_DIM)
    objpose_b = jnp.zeros((D,), jnp.float32)
    merge_w1 = wf32((2 * D, D), 2 * D); merge_b1 = jnp.zeros((D,), jnp.float32)
    merge_w2 = wf32((D, D), D); merge_b2 = jnp.zeros((D,), jnp.float32)
    w1_top, w1_bot = merge_w1[:D], merge_w1[D:]
    params["merge_wh"] = pad_rows(pose_w @ w1_top, PAD16).astype(bf16)
    params["merge_wo"] = pad_rows(objpose_w @ w1_bot, PAD16).astype(bf16)
    params["merge_bm"] = (pose_b @ w1_top + objpose_b @ w1_bot + merge_b1).reshape(1, D)
    params["merge_w2"] = merge_w2.astype(bf16)
    params["merge_b2"] = merge_b2.reshape(1, D)

    # OutputProcess.poseFinal, zero-padded to 128 lanes (lane-dense stores)
    final_w = wf32((D, INPUT_DIM), D)
    final_b = jnp.zeros((INPUT_DIM,), jnp.float32)
    params["final_w"] = jnp.zeros((D, OUT_PAD), jnp.float32).at[:, :INPUT_DIM] \
                           .set(final_w).astype(bf16)
    params["final_b"] = jnp.zeros((1, OUT_PAD), jnp.float32).at[0, :INPUT_DIM].set(final_b)

    # Transformer encoder: per-layer weights stacked along a leading L axis;
    # the 1/sqrt(Dh) attention scale is folded into Wq (and bq, which is 0).
    scale = 1.0 / np.sqrt(Dh)
    wqkv, bqkv, wo, bo = [], [], [], []
    ln1w, ln1b, w1s, b1s, w2s, b2s, ln2w, ln2b = [], [], [], [], [], [], [], []
    for _ in range(L):
        wq, wk, wv = wf32((D, D), D), wf32((D, D), D), wf32((D, D), D)
        wqkv.append(jnp.concatenate([wq * scale, wk, wv], axis=1))
        bqkv.append(jnp.zeros((1, 3 * D), jnp.float32))     # bq already "scaled" (zero)
        wo.append(wf32((D, D), D)); bo.append(zD)
        ln1w.append(jnp.ones((1, D), jnp.float32)); ln1b.append(zD)
        w1s.append(wf32((D, F), D)); b1s.append(jnp.zeros((1, F), jnp.float32))
        w2s.append(wf32((F, D), F)); b2s.append(zD)
        ln2w.append(jnp.ones((1, D), jnp.float32)); ln2b.append(zD)
    params["enc"] = {
        "wqkv": jnp.stack(wqkv).astype(bf16), "bqkv": jnp.stack(bqkv),
        "wo": jnp.stack(wo).astype(bf16), "bo": jnp.stack(bo),
        "ln1w": jnp.stack(ln1w), "ln1b": jnp.stack(ln1b),
        "w1": jnp.stack(w1s).astype(bf16), "b1": jnp.stack(b1s),
        "w2": jnp.stack(w2s).astype(bf16), "b2": jnp.stack(b2s),
        "ln2w": jnp.stack(ln2w), "ln2b": jnp.stack(ln2b),
    }
    return params


# ----------------------------- forward pass ----------------------------------
def forward(params, x, timesteps, batch):
    """
    x:         (B, INPUT_DIM, 1, nframes)
    timesteps: (B,) int32
    batch keys:
      'text_feat'     (B, CLIP_DIM)  -- precomputed CLIP text features
      'hand_side'     python list of 'rh'/'lh', length B
      'shape'         (B, n_shape, HAND_SHAPE_DIM)
      'obj_embedding' (B, n_obj, OBJ_EMBED_DIM)
      'obj_traj'      (B, n_obj, nframes, OBJ_INPUT_DIM)
    returns (B, INPUT_DIM, 1, nframes)
    """
    B = x.shape[0]
    D = LATENT_DIM
    T = x.shape[3]
    pe = params["pe"]                                                 # (MAX_LEN,1,D)

    # --- condition embeddings: one fused Pallas launch -> (5, B, D) ---
    # TODO(synk): CLIP encode_text has no Pallas equivalent; precomputed features used.
    t_in = pe[timesteps, 0, :]                                        # (B, D)
    rh = np.zeros((D,), np.float32)
    lh = np.zeros((D,), np.float32); lh[0] = 1.0
    hside = jnp.asarray(np.stack(
        [rh if hs == "rh" else lh for hs in batch["hand_side"]], axis=0))
    shape_avg = jnp.mean(batch["shape"], axis=1)                      # (B, 10)
    shape_avg = jnp.pad(shape_avg, ((0, 0), (0, PAD16 - HAND_SHAPE_DIM)))
    obj_avg = jnp.mean(batch["obj_embedding"], axis=1)                # (B, 16)

    emb = pallas_cond_embed(params, t_in, batch["text_feat"], hside,
                            shape_avg, obj_avg)                       # (5, B, D)
    emb = jnp.transpose(emb, (1, 0, 2))                               # (B, 5, D) tiny
    P = emb.shape[1]

    # --- per-batch hand / object trajectory streams (padded to 16 lanes) ---
    hand = jnp.transpose(x[:, :, 0, :], (0, 2, 1))                    # (B, T, 12)
    hand = jnp.pad(hand, ((0, 0), (0, 0), (0, PAD16 - INPUT_DIM)))
    obj_mean = jnp.mean(batch["obj_traj"], axis=1)                    # (B, T, 9)
    obj_mean = jnp.pad(obj_mean, ((0, 0), (0, 0), (0, PAD16 - OBJ_INPUT_DIM)))

    pe_s = pe[:P + T, 0, :]                                           # (S, D)

    # --- fused core: merge + concat + PE + L encoder layers + output proj ---
    out = pallas_mdm_core(params, emb, hand, obj_mean, pe_s)          # (B, T, 128)
    out = out[:, :, :INPUT_DIM]                                       # (B, T, 12)
    out = jnp.transpose(out, (0, 2, 1))[:, :, None, :]                # (B, 12, 1, T)
    return out


# ----------------------------- demo -------------------------------------------
if __name__ == "__main__":
    key = jax.random.PRNGKey(0)
    B = 2
    NFRAMES = 11
    NOBJ = 3
    NSHAPE = 4

    k_params, kx, kt, ktext, kshape, kobj, kobjtraj = jax.random.split(key, 7)
    params = init_params(k_params)

    x = jax.random.normal(kx, (B, INPUT_DIM, 1, NFRAMES), jnp.float32)
    timesteps = jax.random.randint(kt, (B,), 0, MAX_LEN, dtype=jnp.int32)
    batch = {
        "text_feat": jax.random.normal(ktext, (B, CLIP_DIM), jnp.float32),
        "hand_side": ["rh", "lh"],
        "shape": jax.random.normal(kshape, (B, NSHAPE, HAND_SHAPE_DIM), jnp.float32),
        "obj_embedding": jax.random.normal(kobj, (B, NOBJ, OBJ_EMBED_DIM), jnp.float32),
        "obj_traj": jax.random.normal(kobjtraj, (B, NOBJ, NFRAMES, OBJ_INPUT_DIM), jnp.float32),
    }

    out = forward(params, x, timesteps, batch)
    out = jax.block_until_ready(out)

    assert out.shape == (B, INPUT_DIM, 1, NFRAMES), out.shape
    assert bool(jnp.all(jnp.isfinite(out)))
    print("KERNEL_OK")
</pallas_src>

<mosaic_0001>
module attributes {stable_mosaic.version = 11 : i64} {
  func.func @_cond_embed_kernel(%arg0: i32, %arg1: memref<2x32xf32, #tpu.memory_space<vmem>>, %arg2: memref<2x16xf32, #tpu.memory_space<vmem>>, %arg3: memref<2x32xf32, #tpu.memory_space<vmem>>, %arg4: memref<2x16xf32, #tpu.memory_space<vmem>>, %arg5: memref<2x16xf32, #tpu.memory_space<vmem>>, %arg6: memref<32x32xbf16, #tpu.memory_space<vmem>>, %arg7: memref<1x32xf32, #tpu.memory_space<vmem>>, %arg8: memref<32x32xbf16, #tpu.memory_space<vmem>>, %arg9: memref<1x32xf32, #tpu.memory_space<vmem>>, %arg10: memref<16x32xbf16, #tpu.memory_space<vmem>>, %arg11: memref<1x32xf32, #tpu.memory_space<vmem>>, %arg12: memref<16x32xbf16, #tpu.memory_space<vmem>>, %arg13: memref<1x32xf32, #tpu.memory_space<vmem>>, %arg14: memref<16x32xbf16, #tpu.memory_space<vmem>>, %arg15: memref<1x32xf32, #tpu.memory_space<vmem>>, %arg16: memref<5x2x32xf32, #tpu.memory_space<vmem>>) attributes {dimension_semantics = [#tpu.dimension_semantics<arbitrary>], iteration_bounds = array<i64: 1>, scalar_prefetch = 0 : i64, scratch_operands = 0 : i64, tpu.core_type = #tpu.core_type<tc>, window_params = [{pipeline_mode = #tpu.pipeline_mode<synchronous>, transform_indices = @transform_0, window_bounds = array<i64: 2, 32>}, {pipeline_mode = #tpu.pipeline_mode<synchronous>, transform_indices = @transform_1, window_bounds = array<i64: 2, 16>}, {pipeline_mode = #tpu.pipeline_mode<synchronous>, transform_indices = @transform_2, window_bounds = array<i64: 2, 32>}, {pipeline_mode = #tpu.pipeline_mode<synchronous>, transform_indices = @transform_3, window_bounds = array<i64: 2, 16>}, {pipeline_mode = #tpu.pipeline_mode<synchronous>, transform_indices = @transform_4, window_bounds = array<i64: 2, 16>}, {pipeline_mode = #tpu.pipeline_mode<synchronous>, transform_indices = @transform_5, window_bounds = array<i64: 32, 32>}, {pipeline_mode = #tpu.pipeline_mode<synchronous>, transform_indices = @transform_6, window_bounds = array<i64: 1, 32>}, {pipeline_mode = #tpu.pipeline_mode<synchronous>, transform_indices = @transform_7, window_bounds = array<i64: 32, 32>}, {pipeline_mode = #tpu.pipeline_mode<synchronous>, transform_indices = @transform_8, window_bounds = array<i64: 1, 32>}, {pipeline_mode = #tpu.pipeline_mode<synchronous>, transform_indices = @transform_9, window_bounds = array<i64: 16, 32>}, {pipeline_mode = #tpu.pipeline_mode<synchronous>, transform_indices = @transform_10, window_bounds = array<i64: 1, 32>}, {pipeline_mode = #tpu.pipeline_mode<synchronous>, transform_indices = @transform_11, window_bounds = array<i64: 16, 32>}, {pipeline_mode = #tpu.pipeline_mode<synchronous>, transform_indices = @transform_12, window_bounds = array<i64: 1, 32>}, {pipeline_mode = #tpu.pipeline_mode<synchronous>, transform_indices = @transform_13, window_bounds = array<i64: 16, 32>}, {pipeline_mode = #tpu.pipeline_mode<synchronous>, transform_indices = @transform_14, window_bounds = array<i64: 1, 32>}, {pipeline_mode = #tpu.pipeline_mode<synchronous>, transform_indices = @transform_15, window_bounds = array<i64: 5, 2, 32>}]} {
    %c0 = arith.constant 0 : index
    %c0_0 = arith.constant 0 : index
    %0 = vector.load %arg1[%c0, %c0_0] : memref<2x32xf32, #tpu.memory_space<vmem>>, vector<2x32xf32>
    %1 = arith.truncf %0 : vector<2x32xf32> to vector<2x32xbf16>
    %c0_1 = arith.constant 0 : index
    %c0_2 = arith.constant 0 : index
    %2 = vector.load %arg6[%c0_1, %c0_2] : memref<32x32xbf16, #tpu.memory_space<vmem>>, vector<32x32xbf16>
    %cst = arith.constant dense<0.000000e+00> : vector<2x32xf32>
    %3 = tpu.matmul %1, %2, %cst {dimension_numbers = #tpu.dot_dimension_numbers<[1], [0], [0], [1], [0, 0, 1, 1], [], []>} : vector<2x32xbf16>, vector<32x32xbf16>, vector<2x32xf32> -> vector<2x32xf32>
    %c0_3 = arith.constant 0 : index
    %c0_4 = arith.constant 0 : index
    %4 = vector.load %arg7[%c0_3, %c0_4] : memref<1x32xf32, #tpu.memory_space<vmem>>, vector<1x32xf32>
    %5 = vector.broadcast %4 : vector<1x32xf32> to vector<2x32xf32>
    %6 = arith.addf %3, %5 : vector<2x32xf32>
    %cst_5 = arith.constant 0.000000e+00 : f32
    %7 = vector.broadcast %cst_5 : f32 to vector<2x32xf32>
    %8 = arith.subf %7, %6 : vector<2x32xf32>
    %9 = math.exp %8 : vector<2x32xf32>
    %cst_6 = arith.constant 1.000000e+00 : f32
    %10 = vector.broadcast %cst_6 : f32 to vector<2x32xf32>
    %11 = arith.addf %10, %9 : vector<2x32xf32>
    %cst_7 = arith.constant 1.000000e+00 : f32
    %12 = vector.broadcast %cst_7 : f32 to vector<2x32xf32>
    %13 = arith.divf %12, %11 : vector<2x32xf32>
    %14 = arith.mulf %6, %13 : vector<2x32xf32>
    %15 = arith.truncf %14 : vector<2x32xf32> to vector<2x32xbf16>
    %c0_8 = arith.constant 0 : index
    %c0_9 = arith.constant 0 : index
    %16 = vector.load %arg8[%c0_8, %c0_9] : memref<32x32xbf16, #tpu.memory_space<vmem>>, vector<32x32xbf16>
    %cst_10 = arith.constant dense<0.000000e+00> : vector<2x32xf32>
    %17 = tpu.matmul %15, %16, %cst_10 {dimension_numbers = #tpu.dot_dimension_numbers<[1], [0], [0], [1], [0, 0, 1, 1], [], []>} : vector<2x32xbf16>, vector<32x32xbf16>, vector<2x32xf32> -> vector<2x32xf32>
    %c0_11 = arith.constant 0 : index
    %c0_12 = arith.constant 0 : index
    %18 = vector.load %arg9[%c0_11, %c0_12] : memref<1x32xf32, #tpu.memory_space<vmem>>, vector<1x32xf32>
    %19 = vector.broadcast %18 : vector<1x32xf32> to vector<2x32xf32>
    %20 = arith.addf %17, %19 : vector<2x32xf32>
    %c0_13 = arith.constant 0 : index
    %c0_14 = arith.constant 0 : index
    %21 = vector.load %arg2[%c0_13, %c0_14] : memref<2x16xf32, #tpu.memory_space<vmem>>, vector<2x16xf32>
    %22 = arith.truncf %21 : vector<2x16xf32> to vector<2x16xbf16>
    %c0_15 = arith.constant 0 : index
    %c0_16 = arith.constant 0 : index
    %23 = vector.load %arg10[%c0_15, %c0_16] : memref<16x32xbf16, #tpu.memory_space<vmem>>, vector<16x32xbf16>
    %cst_17 = arith.constant dense<0.000000e+00> : vector<2x32xf32>
    %24 = tpu.matmul %22, %23, %cst_17 {dimension_numbers = #tpu.dot_dimension_numbers<[1], [0], [0], [1], [0, 0, 1, 1], [], []>} : vector<2x16xbf16>, vector<16x32xbf16>, vector<2x32xf32> -> vector<2x32xf32>
    %c0_18 = arith.constant 0 : index
    %c0_19 = arith.constant 0 : index
    %25 = vector.load %arg11[%c0_18, %c0_19] : memref<1x32xf32, #tpu.memory_space<vmem>>, vector<1x32xf32>
    %26 = vector.broadcast %25 : vector<1x32xf32> to vector<2x32xf32>
    %27 = arith.addf %24, %26 : vector<2x32xf32>
    %c0_20 = arith.constant 0 : index
    %c0_21 = arith.constant 0 : index
    %28 = vector.load %arg3[%c0_20, %c0_21] : memref<2x32xf32, #tpu.memory_space<vmem>>, vector<2x32xf32>
    %c0_22 = arith.constant 0 : index
    %c0_23 = arith.constant 0 : index
    %29 = vector.load %arg4[%c0_22, %c0_23] : memref<2x16xf32, #tpu.memory_space<vmem>>, vector<2x16xf32>
    %30 = arith.truncf %29 : vector<2x16xf32> to vector<2x16xbf16>
    %c0_24 = arith.constant 0 : index
    %c0_25 = arith.constant 0 : index
    %31 = vector.load %arg12[%c0_24, %c0_25] : memref<16x32xbf16, #tpu.memory_space<vmem>>, vector<16x32xbf16>
    %cst_26 = arith.constant dense<0.000000e+00> : vector<2x32xf32>
    %32 = tpu.matmul %30, %31, %cst_26 {dimension_numbers = #tpu.dot_dimension_numbers<[1], [0], [0], [1], [0, 0, 1, 1], [], []>} : vector<2x16xbf16>, vector<16x32xbf16>, vector<2x32xf32> -> vector<2x32xf32>
    %c0_27 = arith.constant 0 : index
    %c0_28 = arith.constant 0 : index
    %33 = vector.load %arg13[%c0_27, %c0_28] : memref<1x32xf32, #tpu.memory_space<vmem>>, vector<1x32xf32>
    %34 = vector.broadcast %33 : vector<1x32xf32> to vector<2x32xf32>
    %35 = arith.addf %32, %34 : vector<2x32xf32>
    %c0_29 = arith.constant 0 : index
    %c0_30 = arith.constant 0 : index
    %36 = vector.load %arg5[%c0_29, %c0_30] : memref<2x16xf32, #tpu.memory_space<vmem>>, vector<2x16xf32>
    %37 = arith.truncf %36 : vector<2x16xf32> to vector<2x16xbf16>
    %c0_31 = arith.constant 0 : index
    %c0_32 = arith.constant 0 : index
    %38 = vector.load %arg14[%c0_31, %c0_32] : memref<16x32xbf16, #tpu.memory_space<vmem>>, vector<16x32xbf16>
    %cst_33 = arith.constant dense<0.000000e+00> : vector<2x32xf32>
    %39 = tpu.matmul %37, %38, %cst_33 {dimension_numbers = #tpu.dot_dimension_numbers<[1], [0], [0], [1], [0, 0, 1, 1], [], []>} : vector<2x16xbf16>, vector<16x32xbf16>, vector<2x32xf32> -> vector<2x32xf32>
    %c0_34 = arith.constant 0 : index
    %c0_35 = arith.constant 0 : index
    %40 = vector.load %arg15[%c0_34, %c0_35] : memref<1x32xf32, #tpu.memory_space<vmem>>, vector<1x32xf32>
    %41 = vector.broadcast %40 : vector<1x32xf32> to vector<2x32xf32>
    %42 = arith.addf %39, %41 : vector<2x32xf32>
    %43 = arith.cmpf one, %20, %20 : vector<2x32xf32>
    %cst_36 = arith.constant 0.000000e+00 : f32
    %44 = vector.broadcast %cst_36 : f32 to vector<2x32xf32>
    %45 = arith.select %43, %44, %20 : vector<2x32xi1>, vector<2x32xf32>
    %cst_37 = arith.constant -3.40282347E+38 : f32
    %cst_38 = arith.constant 3.40282347E+38 : f32
    %46 = vector.broadcast %cst_37 : f32 to vector<2x32xf32>
    %47 = arith.maximumf %46, %45 : vector<2x32xf32>
    %48 = vector.broadcast %cst_38 : f32 to vector<2x32xf32>
    %49 = arith.minimumf %48, %47 : vector<2x32xf32>
    %c0_39 = arith.constant 0 : index
    %c0_40 = arith.constant 0 : index
    %c0_41 = arith.constant 0 : index
    %50 = vector.load %arg16[%c0_39, %c0_40, %c0_41] : memref<5x2x32xf32, #tpu.memory_space<vmem>>, vector<1x2x32xf32>
    %51 = vector.shape_cast %50 : vector<1x2x32xf32> to vector<2x32xf32>
    %52 = vector.shape_cast %49 : vector<2x32xf32> to vector<1x2x32xf32>
    tpu.vector_store %arg16[%c0_39, %c0_40, %c0_41], %52 {strides = array<i32>} : memref<5x2x32xf32, #tpu.memory_space<vmem>>, vector<1x2x32xf32>,
    %53 = arith.cmpf one, %27, %27 : vector<2x32xf32>
    %cst_42 = arith.constant 0.000000e+00 : f32
    %54 = vector.broadcast %cst_42 : f32 to vector<2x32xf32>
    %55 = arith.select %53, %54, %27 : vector<2x32xi1>, vector<2x32xf32>
    %cst_43 = arith.constant -3.40282347E+38 : f32
    %cst_44 = arith.constant 3.40282347E+38 : f32
    %56 = vector.broadcast %cst_43 : f32 to vector<2x32xf32>
    %57 = arith.maximumf %56, %55 : vector<2x32xf32>
    %58 = vector.broadcast %cst_44 : f32 to vector<2x32xf32>
    %59 = arith.minimumf %58, %57 : vector<2x32xf32>
    %c1 = arith.constant 1 : index
    %c0_45 = arith.constant 0 : index
    %c0_46 = arith.constant 0 : index
    %60 = vector.load %arg16[%c1, %c0_45, %c0_46] : memref<5x2x32xf32, #tpu.memory_space<vmem>>, vector<1x2x32xf32>
    %61 = vector.shape_cast %60 : vector<1x2x32xf32> to vector<2x32xf32>
    %62 = vector.shape_cast %59 : vector<2x32xf32> to vector<1x2x32xf32>
    tpu.vector_store %arg16[%c1, %c0_45, %c0_46], %62 {strides = array<i32>} : memref<5x2x32xf32, #tpu.memory_space<vmem>>, vector<1x2x32xf32>,
    %63 = arith.cmpf one, %28, %28 : vector<2x32xf32>
    %cst_47 = arith.constant 0.000000e+00 : f32
    %64 = vector.broadcast %cst_47 : f32 to vector<2x32xf32>
    %65 = arith.select %63, %64, %28 : vector<2x32xi1>, vector<2x32xf32>
    %cst_48 = arith.constant -3.40282347E+38 : f32
    %cst_49 = arith.constant 3.40282347E+38 : f32
    %66 = vector.broadcast %cst_48 : f32 to vector<2x32xf32>
    %67 = arith.maximumf %66, %65 : vector<2x32xf32>
    %68 = vector.broadcast %cst_49 : f32 to vector<2x32xf32>
    %69 = arith.minimumf %68, %67 : vector<2x32xf32>
    %c2 = arith.constant 2 : index
    %c0_50 = arith.constant 0 : index
    %c0_51 = arith.constant 0 : index
    %70 = vector.load %arg16[%c2, %c0_50, %c0_51] : memref<5x2x32xf32, #tpu.memory_space<vmem>>, vector<1x2x32xf32>
    %71 = vector.shape_cast %70 : vector<1x2x32xf32> to vector<2x32xf32>
    %72 = vector.shape_cast %69 : vector<2x32xf32> to vector<1x2x32xf32>
    tpu.vector_store %arg16[%c2, %c0_50, %c0_51], %72 {strides = array<i32>} : memref<5x2x32xf32, #tpu.memory_space<vmem>>, vector<1x2x32xf32>,
    %73 = arith.cmpf one, %35, %35 : vector<2x32xf32>
    %cst_52 = arith.constant 0.000000e+00 : f32
    %74 = vector.broadcast %cst_52 : f32 to vector<2x32xf32>
    %75 = arith.select %73, %74, %35 : vector<2x32xi1>, vector<2x32xf32>
    %cst_53 = arith.constant -3.40282347E+38 : f32
    %cst_54 = arith.constant 3.40282347E+38 : f32
    %76 = vector.broadcast %cst_53 : f32 to vector<2x32xf32>
    %77 = arith.maximumf %76, %75 : vector<2x32xf32>
    %78 = vector.broadcast %cst_54 : f32 to vector<2x32xf32>
    %79 = arith.minimumf %78, %77 : vector<2x32xf32>
    %c3 = arith.constant 3 : index
    %c0_55 = arith.constant 0 : index
    %c0_56 = arith.constant 0 : index
    %80 = vector.load %arg16[%c3, %c0_55, %c0_56] : memref<5x2x32xf32, #tpu.memory_space<vmem>>, vector<1x2x32xf32>
    %81 = vector.shape_cast %80 : vector<1x2x32xf32> to vector<2x32xf32>
    %82 = vector.shape_cast %79 : vector<2x32xf32> to vector<1x2x32xf32>
    tpu.vector_store %arg16[%c3, %c0_55, %c0_56], %82 {strides = array<i32>} : memref<5x2x32xf32, #tpu.memory_space<vmem>>, vector<1x2x32xf32>,
    %83 = arith.cmpf one, %42, %42 : vector<2x32xf32>
    %cst_57 = arith.constant 0.000000e+00 : f32
    %84 = vector.broadcast %cst_57 : f32 to vector<2x32xf32>
    %85 = arith.select %83, %84, %42 : vector<2x32xi1>, vector<2x32xf32>
    %cst_58 = arith.constant -3.40282347E+38 : f32
    %cst_59 = arith.constant 3.40282347E+38 : f32
    %86 = vector.broadcast %cst_58 : f32 to vector<2x32xf32>
    %87 = arith.maximumf %86, %85 : vector<2x32xf32>
    %88 = vector.broadcast %cst_59 : f32 to vector<2x32xf32>
    %89 = arith.minimumf %88, %87 : vector<2x32xf32>
    %c4 = arith.constant 4 : index
    %c0_60 = arith.constant 0 : index
    %c0_61 = arith.constant 0 : index
    %90 = vector.load %arg16[%c4, %c0_60, %c0_61] : memref<5x2x32xf32, #tpu.memory_space<vmem>>, vector<1x2x32xf32>
    %91 = vector.shape_cast %90 : vector<1x2x32xf32> to vector<2x32xf32>
    %92 = vector.shape_cast %89 : vector<2x32xf32> to vector<1x2x32xf32>
    tpu.vector_store %arg16[%c4, %c0_60, %c0_61], %92 {strides = array<i32>} : memref<5x2x32xf32, #tpu.memory_space<vmem>>, vector<1x2x32xf32>,
    return
  }
  func.func @transform_0(%arg0: i32) -> (i32, i32) {
    %c0_i32 = arith.constant 0 : i32
    %c0_i32_0 = arith.constant 0 : i32
    %c0_i32_1 = arith.constant 0 : i32
    return %c0_i32, %c0_i32_0 : i32, i32
  }
  func.func @transform_1(%arg0: i32) -> (i32, i32) {
    %c0_i32 = arith.constant 0 : i32
    %c0_i32_0 = arith.constant 0 : i32
    %c0_i32_1 = arith.constant 0 : i32
    return %c0_i32, %c0_i32_0 : i32, i32
  }
  func.func @transform_2(%arg0: i32) -> (i32, i32) {
    %c0_i32 = arith.constant 0 : i32
    %c0_i32_0 = arith.constant 0 : i32
    %c0_i32_1 = arith.constant 0 : i32
    return %c0_i32, %c0_i32_0 : i32, i32
  }
  func.func @transform_3(%arg0: i32) -> (i32, i32) {
    %c0_i32 = arith.constant 0 : i32
    %c0_i32_0 = arith.constant 0 : i32
    %c0_i32_1 = arith.constant 0 : i32
    return %c0_i32, %c0_i32_0 : i32, i32
  }
  func.func @transform_4(%arg0: i32) -> (i32, i32) {
    %c0_i32 = arith.constant 0 : i32
    %c0_i32_0 = arith.constant 0 : i32
    %c0_i32_1 = arith.constant 0 : i32
    return %c0_i32, %c0_i32_0 : i32, i32
  }
  func.func @transform_5(%arg0: i32) -> (i32, i32) {
    %c0_i32 = arith.constant 0 : i32
    %c0_i32_0 = arith.constant 0 : i32
    %c0_i32_1 = arith.constant 0 : i32
    return %c0_i32, %c0_i32_0 : i32, i32
  }
  func.func @transform_6(%arg0: i32) -> (i32, i32) {
    %c0_i32 = arith.constant 0 : i32
    %c0_i32_0 = arith.constant 0 : i32
    %c0_i32_1 = arith.constant 0 : i32
    return %c0_i32, %c0_i32_0 : i32, i32
  }
  func.func @transform_7(%arg0: i32) -> (i32, i32) {
    %c0_i32 = arith.constant 0 : i32
    %c0_i32_0 = arith.constant 0 : i32
    %c0_i32_1 = arith.constant 0 : i32
    return %c0_i32, %c0_i32_0 : i32, i32
  }
  func.func @transform_8(%arg0: i32) -> (i32, i32) {
    %c0_i32 = arith.constant 0 : i32
    %c0_i32_0 = arith.constant 0 : i32
    %c0_i32_1 = arith.constant 0 : i32
    return %c0_i32, %c0_i32_0 : i32, i32
  }
  func.func @transform_9(%arg0: i32) -> (i32, i32) {
    %c0_i32 = arith.constant 0 : i32
    %c0_i32_0 = arith.constant 0 : i32
    %c0_i32_1 = arith.constant 0 : i32
    return %c0_i32, %c0_i32_0 : i32, i32
  }
  func.func @transform_10(%arg0: i32) -> (i32, i32) {
    %c0_i32 = arith.constant 0 : i32
    %c0_i32_0 = arith.constant 0 : i32
    %c0_i32_1 = arith.constant 0 : i32
    return %c0_i32, %c0_i32_0 : i32, i32
  }
  func.func @transform_11(%arg0: i32) -> (i32, i32) {
    %c0_i32 = arith.constant 0 : i32
    %c0_i32_0 = arith.constant 0 : i32
    %c0_i32_1 = arith.constant 0 : i32
    return %c0_i32, %c0_i32_0 : i32, i32
  }
  func.func @transform_12(%arg0: i32) -> (i32, i32) {
    %c0_i32 = arith.constant 0 : i32
    %c0_i32_0 = arith.constant 0 : i32
    %c0_i32_1 = arith.constant 0 : i32
    return %c0_i32, %c0_i32_0 : i32, i32
  }
  func.func @transform_13(%arg0: i32) -> (i32, i32) {
    %c0_i32 = arith.constant 0 : i32
    %c0_i32_0 = arith.constant 0 : i32
    %c0_i32_1 = arith.constant 0 : i32
    return %c0_i32, %c0_i32_0 : i32, i32
  }
  func.func @transform_14(%arg0: i32) -> (i32, i32) {
    %c0_i32 = arith.constant 0 : i32
    %c0_i32_0 = arith.constant 0 : i32
    %c0_i32_1 = arith.constant 0 : i32
    return %c0_i32, %c0_i32_0 : i32, i32
  }
  func.func @transform_15(%arg0: i32) -> (i32, i32, i32) {
    %c0_i32 = arith.constant 0 : i32
    %c0_i32_0 = arith.constant 0 : i32
    %c0_i32_1 = arith.constant 0 : i32
    %c0_i32_2 = arith.constant 0 : i32
    return %c0_i32, %c0_i32_0, %c0_i32_1 : i32, i32, i32
  }
}

</mosaic_0001>

<llo_original>
// kernel: tpu_custom_call.1
$region0: #{tpu_custom_call.1}
  #allocation0 [shape = 'u32[]', space=smem, size = 0x4, offset = 0x4, fixed_abs, tag = 'smem constant byte address 0x4 - core index']
  #allocation1 [shape = 'u32[144,128]{1,0:T(1,128)}', space=vmem, size = 0x12000, scoped, tag = 'internal scratch']
  %s0 = inlined_call_operand.hbm [shape: f32[2,32], index: 0, kind: input, shape index: {}]
  %s1 = inlined_call_operand.hbm [shape: f32[2,16], index: 1, kind: input, shape index: {}]
  %s2 = inlined_call_operand.hbm [shape: f32[2,32], index: 2, kind: input, shape index: {}]
  %s3 = inlined_call_operand.hbm [shape: f32[2,16], index: 3, kind: input, shape index: {}]
  %s4 = inlined_call_operand.hbm [shape: f32[2,16], index: 4, kind: input, shape index: {}]
  %s5 = inlined_call_operand.vmem [shape: bf16[32,32], index: 5, kind: input, shape index: {}]
  %s6 = inlined_call_operand.vmem [shape: f32[1,32], index: 6, kind: input, shape index: {}]
  %s7 = inlined_call_operand.hbm [shape: bf16[32,32], index: 7, kind: input, shape index: {}]
  %s8 = inlined_call_operand.hbm [shape: f32[1,32], index: 8, kind: input, shape index: {}]
  %s9 = inlined_call_operand.vmem [shape: bf16[16,32], index: 9, kind: input, shape index: {}]
  %s10 = inlined_call_operand.hbm [shape: f32[1,32], index: 10, kind: input, shape index: {}]
  %s11 = inlined_call_operand.vmem [shape: bf16[16,32], index: 11, kind: input, shape index: {}]
  %s12 = inlined_call_operand.vmem [shape: f32[1,32], index: 12, kind: input, shape index: {}]
  %s13 = inlined_call_operand.vmem [shape: bf16[16,32], index: 13, kind: input, shape index: {}]
  %s14 = inlined_call_operand.vmem [shape: f32[1,32], index: 14, kind: input, shape index: {}]
  %s15 = inlined_call_operand.hbm [shape: f32[5,2,32], index: 15, kind: output, shape index: {}]
  %s16 = sld [smem:[#allocation0]]
  $region102: #{tpu_custom_call.1} parent=0
    _
  %s18 = ssub.s32 1, %s16
  %s19 = scalar_select 0, %s18, %s16
  $region1: #{tpu_custom_call.1} parent=0
    #allocation2 [shape = 'u8[1024]{0}', space=vmem, size = 0x400, scoped, tag = 'input window, operand 0, single buffered']
    #allocation3 [shape = 's32[1]{0}', space=sflag, size = 0x4, scoped, tag = 'scoped memory for tpu_custom_call.1']
    #allocation4 [shape = 's32[1]{0}', space=sflag, size = 0x4, scoped, tag = 'scoped memory for tpu_custom_call.1']
    #allocation5 [shape = 'u8[1024]{0}', space=vmem, size = 0x400, scoped, tag = 'input window, operand 1, single buffered']
    #allocation6 [shape = 's32[1]{0}', space=sflag, size = 0x4, scoped, tag = 'scoped memory for tpu_custom_call.1']
    #allocation7 [shape = 'u8[1024]{0}', space=vmem, size = 0x400, scoped, tag = 'input window, operand 2, single buffered']
    #allocation8 [shape = 'u8[1024]{0}', space=vmem, size = 0x400, scoped, tag = 'input window, operand 3, single buffered']
    #allocation9 [shape = 's32[1]{0}', space=sflag, size = 0x4, scoped, tag = 'scoped memory for tpu_custom_call.1']
    #allocation10 [shape = 'u8[1024]{0}', space=vmem, size = 0x400, scoped, tag = 'input window, operand 4, single buffered']
    #allocation11 [shape = 'u8[8192]{0}', space=vmem, size = 0x2000, scoped, tag = 'input window, operand 7, single buffered']
    #allocation12 [shape = 's32[1]{0}', space=sflag, size = 0x4, scoped, tag = 'scoped memory for tpu_custom_call.1']
    #allocation13 [shape = 'u8[512]{0}', space=vmem, size = 0x400, scoped, tag = 'input window, operand 8, single buffered']
    #allocation14 [shape = 'u8[512]{0}', space=vmem, size = 0x400, scoped, tag = 'input window, operand 10, single buffered']
    #allocation15 [shape = 's32[1]{0}', space=sflag, size = 0x4, scoped, tag = 'scoped memory for tpu_custom_call.1']
    #allocation16 [shape = 'u8[5120]{0}', space=vmem, size = 0x1400, scoped, tag = 'output window, operand 0, single buffered']
    %20 = vsyncpa [#allocation3], 0
    %21 = vsyncpa [#allocation6], 0
    %22 = vsyncpa [#allocation9], 0
    %23 = vsyncpa [#allocation12], 0
    %24 = vsyncpa [#allocation15], 0
    %25 = vsyncpa [#allocation4], 0
    // Predicated region
    $region2: #{tpu_custom_call.1} parent=1 // pred_check
      _
    $region3: #{tpu_custom_call.1} parent=1 // pred_check_branch
      %27 = sbr.rel (0) target = $region5
    $region4: #{tpu_custom_call.1} parent=1 // pred_region
      %s29 = ssub.s32 32, 32
      %30 = vsyncadd [#allocation3], %s29
      %s32 = sshll.u32 [#allocation2], 4
      %s33 = int_to_ptr.vmem [resolvable:$true] %s32
      %35 = dma.hbm_to_vmem [thread:$0]  %s0, 32, %s33, [#allocation3]
    $region5: #{tpu_custom_call.1} parent=1 // pred_fallthru
      _
    // Predicated region
    $region6: #{tpu_custom_call.1} parent=1 // pred_check
      _
    $region7: #{tpu_custom_call.1} parent=1 // pred_check_branch
      %37 = sbr.rel (0) target = $region9
    $region8: #{tpu_custom_call.1} parent=1 // pred_region
      %s39 = ssub.s32 32, 32
      %40 = vsyncadd [#allocation6], %s39
      %s42 = sshll.u32 [#allocation5], 4
      %s43 = int_to_ptr.vmem [resolvable:$true] %s42
      %45 = dma.hbm_to_vmem [thread:$0]  %s1, 32, %s43, [#allocation6]
    $region9: #{tpu_custom_call.1} parent=1 // pred_fallthru
      _
    // Predicated region
    $region10: #{tpu_custom_call.1} parent=1 // pred_check
      _
    $region11: #{tpu_custom_call.1} parent=1 // pred_check_branch
      %47 = sbr.rel (0) target = $region13
    $region12: #{tpu_custom_call.1} parent=1 // pred_region
      %s49 = ssub.s32 32, 32
      %50 = vsyncadd [#allocation6], %s49
      %s52 = sshll.u32 [#allocation7], 4
      %s53 = int_to_ptr.vmem [resolvable:$true] %s52
      %55 = dma.hbm_to_vmem [thread:$0]  %s2, 32, %s53, [#allocation6]
    $region13: #{tpu_custom_call.1} parent=1 // pred_fallthru
      _
    // Predicated region
    $region14: #{tpu_custom_call.1} parent=1 // pred_check
      _
    $region15: #{tpu_custom_call.1} parent=1 // pred_check_branch
      %57 = sbr.rel (0) target = $region17
    $region16: #{tpu_custom_call.1} parent=1 // pred_region
      %s59 = ssub.s32 32, 32
      %60 = vsyncadd [#allocation9], %s59
      %s62 = sshll.u32 [#allocation8], 4
      %s63 = int_to_ptr.vmem [resolvable:$true] %s62
      %65 = dma.hbm_to_vmem [thread:$0]  %s3, 32, %s63, [#allocation9]
    $region17: #{tpu_custom_call.1} parent=1 // pred_fallthru
      _
    // Predicated region
    $region18: #{tpu_custom_call.1} parent=1 // pred_check
      _
    $region19: #{tpu_custom_call.1} parent=1 // pred_check_branch
      %67 = sbr.rel (0) target = $region21
    $region20: #{tpu_custom_call.1} parent=1 // pred_region
      %s69 = ssub.s32 32, 32
      %70 = vsyncadd [#allocation9], %s69
      %s72 = sshll.u32 [#allocation10], 4
      %s73 = int_to_ptr.vmem [resolvable:$true] %s72
      %75 = dma.hbm_to_vmem [thread:$0]  %s4, 32, %s73, [#allocation9]
    $region21: #{tpu_custom_call.1} parent=1 // pred_fallthru
      _
    // Predicated region
    $region22: #{tpu_custom_call.1} parent=1 // pred_check
      _
    $region23: #{tpu_custom_call.1} parent=1 // pred_check_branch
      %77 = sbr.rel (0) target = $region25
    $region24: #{tpu_custom_call.1} parent=1 // pred_region
      _
    $region25: #{tpu_custom_call.1} parent=1 // pred_fallthru
      _
    // Predicated region
    $region26: #{tpu_custom_call.1} parent=1 // pred_check
      _
    $region27: #{tpu_custom_call.1} parent=1 // pred_check_branch
      %79 = sbr.rel (0) target = $region29
    $region28: #{tpu_custom_call.1} parent=1 // pred_region
      _
    $region29: #{tpu_custom_call.1} parent=1 // pred_fallthru
      _
    // Predicated region
    $region30: #{tpu_custom_call.1} parent=1 // pred_check
      _
    $region31: #{tpu_custom_call.1} parent=1 // pred_check_branch
      %81 = sbr.rel (0) target = $region33
    $region32: #{tpu_custom_call.1} parent=1 // pred_region
      %s83 = ssub.s32 256, 256
      %84 = vsyncadd [#allocation12], %s83
      %s85 = sshll.u32 [#allocation11], 4
      %s86 = int_to_ptr.vmem [resolvable:$true] %s85
      %91 = dma.hbm_to_vmem [thread:$0]  %s7, 256, %s86, [#allocation12], 64, 64, 4
    $region33: #{tpu_custom_call.1} parent=1 // pred_fallthru
      _
    // Predicated region
    $region34: #{tpu_custom_call.1} parent=1 // pred_check
      _
    $region35: #{tpu_custom_call.1} parent=1 // pred_check_branch
      %93 = sbr.rel (0) target = $region37
    $region36: #{tpu_custom_call.1} parent=1 // pred_region
      %s95 = ssub.s32 16, 16
      %96 = vsyncadd [#allocation12], %s95
      %s98 = sshll.u32 [#allocation13], 4
      %s99 = int_to_ptr.vmem [resolvable:$true] %s98
      %101 = dma.hbm_to_vmem [thread:$0]  %s8, 16, %s99, [#allocation12]
    $region37: #{tpu_custom_call.1} parent=1 // pred_fallthru
      _
    // Predicated region
    $region38: #{tpu_custom_call.1} parent=1 // pred_check
      _
    $region39: #{tpu_custom_call.1} parent=1 // pred_check_branch
      %103 = sbr.rel (0) target = $region41
    $region40: #{tpu_custom_call.1} parent=1 // pred_region
      _
    $region41: #{tpu_custom_call.1} parent=1 // pred_fallthru
      _
    // Predicated region
    $region42: #{tpu_custom_call.1} parent=1 // pred_check
      _
    $region43: #{tpu_custom_call.1} parent=1 // pred_check_branch
      %105 = sbr.rel (0) target = $region45
    $region44: #{tpu_custom_call.1} parent=1 // pred_region
      %s107 = ssub.s32 16, 16
      %108 = vsyncadd [#allocation15], %s107
      %s110 = sshll.u32 [#allocation14], 4
      %s111 = int_to_ptr.vmem [resolvable:$true] %s110
      %113 = dma.hbm_to_vmem [thread:$0]  %s10, 16, %s111, [#allocation15]
    $region45: #{tpu_custom_call.1} parent=1 // pred_fallthru
      _
    // Predicated region
    $region46: #{tpu_custom_call.1} parent=1 // pred_check
      _
    $region47: #{tpu_custom_call.1} parent=1 // pred_check_branch
      %115 = sbr.rel (0) target = $region49
    $region48: #{tpu_custom_call.1} parent=1 // pred_region
      _
    $region49: #{tpu_custom_call.1} parent=1 // pred_fallthru
      _
    // Predicated region
    $region50: #{tpu_custom_call.1} parent=1 // pred_check
      _
    $region51: #{tpu_custom_call.1} parent=1 // pred_check_branch
      %117 = sbr.rel (0) target = $region53
    $region52: #{tpu_custom_call.1} parent=1 // pred_region
      _
    $region53: #{tpu_custom_call.1} parent=1 // pred_fallthru
      _
    // Predicated region
    $region54: #{tpu_custom_call.1} parent=1 // pred_check
      _
    $region55: #{tpu_custom_call.1} parent=1 // pred_check_branch
      %119 = sbr.rel (0) target = $region57
    $region56: #{tpu_custom_call.1} parent=1 // pred_region
      _
    $region57: #{tpu_custom_call.1} parent=1 // pred_fallthru
      _
    // Predicated region
    $region58: #{tpu_custom_call.1} parent=1 // pred_check
      _
    $region59: #{tpu_custom_call.1} parent=1 // pred_check_branch
      %121 = sbr.rel (0) target = $region61
    $region60: #{tpu_custom_call.1} parent=1 // pred_region
      _
    $region61: #{tpu_custom_call.1} parent=1 // pred_fallthru
      _
    // Predicated region
    $region62: #{tpu_custom_call.1} parent=1 // pred_check
      _
    $region63: #{tpu_custom_call.1} parent=1 // pred_check_branch
      %123 = sbr.rel (0) target = $region65
    $region64: #{tpu_custom_call.1} parent=1 // pred_region
      %124 = dma.done [#allocation3], 32
    $region65: #{tpu_custom_call.1} parent=1 // pred_fallthru
      _
    // Predicated region
    $region66: #{tpu_custom_call.1} parent=1 // pred_check
      _
    $region67: #{tpu_custom_call.1} parent=1 // pred_check_branch
      %126 = sbr.rel (0) target = $region69
    $region68: #{tpu_custom_call.1} parent=1 // pred_region
      %127 = dma.done [#allocation6], 32
    $region69: #{tpu_custom_call.1} parent=1 // pred_fallthru
      _
    // Predicated region
    $region70: #{tpu_custom_call.1} parent=1 // pred_check
      _
    $region71: #{tpu_custom_call.1} parent=1 // pred_check_branch
      %129 = sbr.rel (0) target = $region73
    $region72: #{tpu_custom_call.1} parent=1 // pred_region
      %130 = dma.done [#allocation6], 32
    $region73: #{tpu_custom_call.1} parent=1 // pred_fallthru
      _
    // Predicated region
    $region74: #{tpu_custom_call.1} parent=1 // pred_check
      _
    $region75: #{tpu_custom_call.1} parent=1 // pred_check_branch
      %132 = sbr.rel (0) target = $region77
    $region76: #{tpu_custom_call.1} parent=1 // pred_region
      %133 = dma.done [#allocation9], 32
    $region77: #{tpu_custom_call.1} parent=1 // pred_fallthru
      _
    // Predicated region
    $region78: #{tpu_custom_call.1} parent=1 // pred_check
      _
    $region79: #{tpu_custom_call.1} parent=1 // pred_check_branch
      %135 = sbr.rel (0) target = $region81
    $region80: #{tpu_custom_call.1} parent=1 // pred_region
      %136 = dma.done [#allocation9], 32
    $region81: #{tpu_custom_call.1} parent=1 // pred_fallthru
      _
    // Predicated region
    $region82: #{tpu_custom_call.1} parent=1 // pred_check
      _
    $region83: #{tpu_custom_call.1} parent=1 // pred_check_branch
      %138 = sbr.rel (0) target = $region85
    $region84: #{tpu_custom_call.1} parent=1 // pred_region
      %139 = dma.done [#allocation12], 256
    $region85: #{tpu_custom_call.1} parent=1 // pred_fallthru
      _
    // Predicated region
    $region86: #{tpu_custom_call.1} parent=1 // pred_check
      _
    $region87: #{tpu_custom_call.1} parent=1 // pred_check_branch
      %141 = sbr.rel (0) target = $region89
    $region88: #{tpu_custom_call.1} parent=1 // pred_region
      %142 = dma.done [#allocation12], 16
    $region89: #{tpu_custom_call.1} parent=1 // pred_fallthru
      _
    // Predicated region
    $region90: #{tpu_custom_call.1} parent=1 // pred_check
      _
    $region91: #{tpu_custom_call.1} parent=1 // pred_check_branch
      %144 = sbr.rel (0) target = $region93
    $region92: #{tpu_custom_call.1} parent=1 // pred_region
      %145 = dma.done [#allocation15], 16
    $region93: #{tpu_custom_call.1} parent=1 // pred_fallthru
      _
    %v147 = vld [vmem:[#allocation2] sm:$0x3]
    %v148 = vpack.c.bf16 %v147, %v147
    %v149 = vld [vmem:[%s5] sm:$0xf]
    %v150 = vld [vmem:[%s5 + $0x4] sm:$0xf]
    %v151 = vld [vmem:[%s5 + $0x8] sm:$0xf]
    %v152 = vld [vmem:[%s5 + $0xc] sm:$0xf]
    %v153 = vld [vmem:[%s6] sm:$0x1]
    %v155 = vlaneseq
    %v156 = vshrl.u32 %v155, 7
    %v157 = vsub.s32 0, %v156
    %v158 = vrot.slane %v153, %v157
    %v164 = vunpack.c.l.b16 %v149
    %v165 = vunpack.c.l.b16 %v150
    %v166 = vunpack.c.l.b16 %v151
    %v167 = vunpack.c.l.b16 %v152
    %v168 = vpack.c.b16 %v165, %v164
    %v169 = vpack.c.b16 %v167, %v166
    %vm172 = vcmask 261120
    %v174 = vsel %vm172, %v148, 0
    %176 = vmatprep.subr.bf16.mxu0 0
    %177 = vmatpush1.bf16.msra.mxu0 %v168
    %178 = vmatprep.subr.bf16.mxu0 0
    %179 = vmatpush1.bf16.msra.mxu0 %v169
    %180 = vmatprep.subr.bf16.mxu0 0
    %181 = vmatpush1.bf16.msra.mxu0 0
    %182 = vmatprep.subr.bf16.mxu0 0
    %183 = vmatpush1.bf16.msra.mxu0 0
    %184 = vmatprep.subr.bf16.mxu0 0
    %185 = vmatpush1.bf16.msra.mxu0 0
    %186 = vmatprep.subr.bf16.mxu0 0
    %187 = vmatpush1.bf16.msra.mxu0 0
    %188 = vmatprep.subr.bf16.mxu0 0
    %189 = vmatpush1.bf16.msra.mxu0 0
    %190 = vmatprep.subr.bf16.mxu0 0
    %191 = vmatpush1.bf16.msra.mxu0 0
    %192 = vmatprep.subr.bf16.mxu0 0
    %193 = vmatpush1.bf16.msra.mxu0 0
    %194 = vmatprep.subr.bf16.mxu0 0
    %195 = vmatpush1.bf16.msra.mxu0 0
    %196 = vmatprep.subr.bf16.mxu0 0
    %197 = vmatpush1.bf16.msra.mxu0 0
    %198 = vmatprep.subr.bf16.mxu0 0
    %199 = vmatpush1.bf16.msra.mxu0 0
    %200 = vmatprep.subr.bf16.mxu0 0
    %201 = vmatpush1.bf16.msra.mxu0 0
    %202 = vmatprep.subr.bf16.mxu0 0
    %203 = vmatpush1.bf16.msra.mxu0 0
    %204 = vmatprep.subr.bf16.mxu0 0
    %205 = vmatpush1.bf16.msra.mxu0 0
    %206 = vmatprep.subr.bf16.mxu0 0
    %207 = vmatpush1.bf16.msra.mxu0 0
    %208 = vmatprep.mubr.bf16.mxu0 0
    %209 = vmatmul.mubr.bf16.gmra.mrb[0].mxu0 %v174
    %v210 = vpop.f32.mrb[0].mxu0
    %v211 = vadd.f32 %v158, %v210
    %v212 = vpop.f32.mrb[0].mxu0
    %v213 = vpop.f32.mrb[0].mxu0
    %v214 = vpop.f32.mrb[0].mxu0
    %215 = vdwg.mxu0
    %v216 = vsub.f32 0.0, %v211
    %v217 = vmul.f32 %v216, 1.442695
    %v218 = vpow.pop %v217
    %v219 = vadd.f32 %v218, 1.0
    %v220 = vrcp.pop %v219
    %v221 = vmul.f32 1.0, %v220
    %v222 = vmul.f32 %v211, %v221
    %v223 = vpack.c.bf16 %v222, %v222
    %v224 = vld [vmem:[#allocation11] sm:$0xf]
    %v225 = vld [vmem:[#allocation11 + $0x4] sm:$0xf]
    %v226 = vld [vmem:[#allocation11 + $0x8] sm:$0xf]
    %v227 = vld [vmem:[#allocation11 + $0xc] sm:$0xf]
    %v228 = vld [vmem:[#allocation13] sm:$0x1]
    %v230 = vlaneseq
    %v231 = vshrl.u32 %v230, 7
    %v232 = vsub.s32 0, %v231
    %v233 = vrot.slane %v228, %v232
    %v239 = vunpack.c.l.b16 %v224
    %v240 = vunpack.c.l.b16 %v225
    %v241 = vunpack.c.l.b16 %v226
    %v242 = vunpack.c.l.b16 %v227
    %v243 = vpack.c.b16 %v240, %v239
    %v244 = vpack.c.b16 %v242, %v241
    %v248 = vsel %vm172, %v223, 0
    %250 = vmatprep.subr.bf16.mxu0 0
    %251 = vmatpush1.bf16.msra.mxu0 %v243
    %252 = vmatprep.subr.bf16.mxu0 0
    %253 = vmatpush1.bf16.msra.mxu0 %v244
    %254 = vmatprep.subr.bf16.mxu0 0
    %255 = vmatpush1.bf16.msra.mxu0 0
    %256 = vmatprep.subr.bf16.mxu0 0
    %257 = vmatpush1.bf16.msra.mxu0 0
    %258 = vmatprep.subr.bf16.mxu0 0
    %259 = vmatpush1.bf16.msra.mxu0 0
    %260 = vmatprep.subr.bf16.mxu0 0
    %261 = vmatpush1.bf16.msra.mxu0 0
    %262 = vmatprep.subr.bf16.mxu0 0
    %263 = vmatpush1.bf16.msra.mxu0 0
    %264 = vmatprep.subr.bf16.mxu0 0
    %265 = vmatpush1.bf16.msra.mxu0 0
    %266 = vmatprep.subr.bf16.mxu0 0
    %267 = vmatpush1.bf16.msra.mxu0 0
    %268 = vmatprep.subr.bf16.mxu0 0
    %269 = vmatpush1.bf16.msra.mxu0 0
    %270 = vmatprep.subr.bf16.mxu0 0
    %271 = vmatpush1.bf16.msra.mxu0 0
    %272 = vmatprep.subr.bf16.mxu0 0
    %273 = vmatpush1.bf16.msra.mxu0 0
    %274 = vmatprep.subr.bf16.mxu0 0
    %275 = vmatpush1.bf16.msra.mxu0 0
    %276 = vmatprep.subr.bf16.mxu0 0
    %277 = vmatpush1.bf16.msra.mxu0 0
    %278 = vmatprep.subr.bf16.mxu0 0
    %279 = vmatpush1.bf16.msra.mxu0 0
    %280 = vmatprep.subr.bf16.mxu0 0
    %281 = vmatpush1.bf16.msra.mxu0 0
    %282 = vmatprep.mubr.bf16.mxu0 0
    %283 = vmatmul.mubr.bf16.gmra.mrb[0].mxu0 %v248
    %v284 = vpop.f32.mrb[0].mxu0
    %v285 = vadd.f32 %v233, %v284
    %v286 = vpop.f32.mrb[0].mxu0
    %v287 = vpop.f32.mrb[0].mxu0
    %v288 = vpop.f32.mrb[0].mxu0
    %289 = vdwg.mxu0
    %v290 = vld [vmem:[#allocation5] sm:$0x3]
    %v291 = vpack.c.bf16 %v290, %v290
    %v292 = vld [vmem:[%s9] sm:$0xf]
    %v293 = vld [vmem:[%s9 + $0x4] sm:$0xf]
    %v294 = vld [vmem:[#allocation14] sm:$0x1]
    %v296 = vlaneseq
    %v297 = vshrl.u32 %v296, 7
    %v298 = vsub.s32 0, %v297
    %v299 = vrot.slane %v294, %v298
    %v303 = vunpack.c.l.b16 %v292
    %v304 = vunpack.c.l.b16 %v293
    %v305 = vpack.c.b16 %v304, %v303
    %vm307 = vcmask 130048
    %v309 = vsel %vm307, %v291, 0
    %311 = vmatprep.subr.bf16.mxu0 0
    %312 = vmatpush1.bf16.msra.mxu0 %v305
    %313 = vmatprep.subr.bf16.mxu0 0
    %314 = vmatpush1.bf16.msra.mxu0 0
    %315 = vmatprep.subr.bf16.mxu0 0
    %316 = vmatpush1.bf16.msra.mxu0 0
    %317 = vmatprep.subr.bf16.mxu0 0
    %318 = vmatpush1.bf16.msra.mxu0 0
    %319 = vmatprep.subr.bf16.mxu0 0
    %320 = vmatpush1.bf16.msra.mxu0 0
    %321 = vmatprep.subr.bf16.mxu0 0
    %322 = vmatpush1.bf16.msra.mxu0 0
    %323 = vmatprep.subr.bf16.mxu0 0
    %324 = vmatpush1.bf16.msra.mxu0 0
    %325 = vmatprep.subr.bf16.mxu0 0
    %326 = vmatpush1.bf16.msra.mxu0 0
    %327 = vmatprep.subr.bf16.mxu0 0
    %328 = vmatpush1.bf16.msra.mxu0 0
    %329 = vmatprep.subr.bf16.mxu0 0
    %330 = vmatpush1.bf16.msra.mxu0 0
    %331 = vmatprep.subr.bf16.mxu0 0
    %332 = vmatpush1.bf16.msra.mxu0 0
    %333 = vmatprep.subr.bf16.mxu0 0
    %334 = vmatpush1.bf16.msra.mxu0 0
    %335 = vmatprep.subr.bf16.mxu0 0
    %336 = vmatpush1.bf16.msra.mxu0 0
    %337 = vmatprep.subr.bf16.mxu0 0
    %338 = vmatpush1.bf16.msra.mxu0 0
    %339 = vmatprep.subr.bf16.mxu0 0
    %340 = vmatpush1.bf16.msra.mxu0 0
    %341 = vmatprep.subr.bf16.mxu0 0
    %342 = vmatpush1.bf16.msra.mxu0 0
    %343 = vmatprep.mubr.bf16.mxu0 0
    %344 = vmatmul.mubr.bf16.gmra.mrb[0].mxu0 %v309
    %v345 = vpop.f32.mrb[0].mxu0
    %v346 = vadd.f32 %v299, %v345
    %v347 = vpop.f32.mrb[0].mxu0
    %v348 = vpop.f32.mrb[0].mxu0
    %v349 = vpop.f32.mrb[0].mxu0
    %350 = vdwg.mxu0
    %v351 = vld [vmem:[#allocation7] sm:$0x3]
    %v352 = vld [vmem:[#allocation8] sm:$0x3]
    %v353 = vpack.c.bf16 %v352, %v352
    %v354 = vld [vmem:[%s11] sm:$0xf]
    %v355 = vld [vmem:[%s11 + $0x4] sm:$0xf]
    %v356 = vld [vmem:[%s12] sm:$0x1]
    %v358 = vlaneseq
    %v359 = vshrl.u32 %v358, 7
    %v360 = vsub.s32 0, %v359
    %v361 = vrot.slane %v356, %v360
    %v365 = vunpack.c.l.b16 %v354
    %v366 = vunpack.c.l.b16 %v355
    %v367 = vpack.c.b16 %v366, %v365
    %v370 = vsel %vm307, %v353, 0
    %372 = vmatprep.subr.bf16.mxu0 0
    %373 = vmatpush1.bf16.msra.mxu0 %v367
    %374 = vmatprep.subr.bf16.mxu0 0
    %375 = vmatpush1.bf16.msra.mxu0 0
    %376 = vmatprep.subr.bf16.mxu0 0
    %377 = vmatpush1.bf16.msra.mxu0 0
    %378 = vmatprep.subr.bf16.mxu0 0
    %379 = vmatpush1.bf16.msra.mxu0 0
    %380 = vmatprep.subr.bf16.mxu0 0
    %381 = vmatpush1.bf16.msra.mxu0 0
    %382 = vmatprep.subr.bf16.mxu0 0
    %383 = vmatpush1.bf16.msra.mxu0 0
    %384 = vmatprep.subr.bf16.mxu0 0
    %385 = vmatpush1.bf16.msra.mxu0 0
    %386 = vmatprep.subr.bf16.mxu0 0
    %387 = vmatpush1.bf16.msra.mxu0 0
    %388 = vmatprep.subr.bf16.mxu0 0
    %389 = vmatpush1.bf16.msra.mxu0 0
    %390 = vmatprep.subr.bf16.mxu0 0
    %391 = vmatpush1.bf16.msra.mxu0 0
    %392 = vmatprep.subr.bf16.mxu0 0
    %393 = vmatpush1.bf16.msra.mxu0 0
    %394 = vmatprep.subr.bf16.mxu0 0
    %395 = vmatpush1.bf16.msra.mxu0 0
    %396 = vmatprep.subr.bf16.mxu0 0
    %397 = vmatpush1.bf16.msra.mxu0 0
    %398 = vmatprep.subr.bf16.mxu0 0
    %399 = vmatpush1.bf16.msra.mxu0 0
    %400 = vmatprep.subr.bf16.mxu0 0
    %401 = vmatpush1.bf16.msra.mxu0 0
    %402 = vmatprep.subr.bf16.mxu0 0
    %403 = vmatpush1.bf16.msra.mxu0 0
    %404 = vmatprep.mubr.bf16.mxu0 0
    %405 = vmatmul.mubr.bf16.gmra.mrb[0].mxu0 %v370
    %v406 = vpop.f32.mrb[0].mxu0
    %v407 = vadd.f32 %v361, %v406
    %v408 = vpop.f32.mrb[0].mxu0
    %v409 = vpop.f32.mrb[0].mxu0
    %v410 = vpop.f32.mrb[0].mxu0
    %411 = vdwg.mxu0
    %v412 = vld [vmem:[#allocation10] sm:$0x3]
    %v413 = vpack.c.bf16 %v412, %v412
    %v414 = vld [vmem:[%s13] sm:$0xf]
    %v415 = vld [vmem:[%s13 + $0x4] sm:$0xf]
    %v416 = vld [vmem:[%s14] sm:$0x1]
    %v418 = vlaneseq
    %v419 = vshrl.u32 %v418, 7
    %v420 = vsub.s32 0, %v419
    %v421 = vrot.slane %v416, %v420
    %v425 = vunpack.c.l.b16 %v414
    %v426 = vunpack.c.l.b16 %v415
    %v427 = vpack.c.b16 %v426, %v425
    %v430 = vsel %vm307, %v413, 0
    %432 = vmatprep.subr.bf16.mxu0 0
    %433 = vmatpush1.bf16.msra.mxu0 %v427
    %434 = vmatprep.subr.bf16.mxu0 0
    %435 = vmatpush1.bf16.msra.mxu0 0
    %436 = vmatprep.subr.bf16.mxu0 0
    %437 = vmatpush1.bf16.msra.mxu0 0
    %438 = vmatprep.subr.bf16.mxu0 0
    %439 = vmatpush1.bf16.msra.mxu0 0
    %440 = vmatprep.subr.bf16.mxu0 0
    %441 = vmatpush1.bf16.msra.mxu0 0
    %442 = vmatprep.subr.bf16.mxu0 0
    %443 = vmatpush1.bf16.msra.mxu0 0
    %444 = vmatprep.subr.bf16.mxu0 0
    %445 = vmatpush1.bf16.msra.mxu0 0
    %446 = vmatprep.subr.bf16.mxu0 0
    %447 = vmatpush1.bf16.msra.mxu0 0
    %448 = vmatprep.subr.bf16.mxu0 0
    %449 = vmatpush1.bf16.msra.mxu0 0
    %450 = vmatprep.subr.bf16.mxu0 0
    %451 = vmatpush1.bf16.msra.mxu0 0
    %452 = vmatprep.subr.bf16.mxu0 0
    %453 = vmatpush1.bf16.msra.mxu0 0
    %454 = vmatprep.subr.bf16.mxu0 0
    %455 = vmatpush1.bf16.msra.mxu0 0
    %456 = vmatprep.subr.bf16.mxu0 0
    %457 = vmatpush1.bf16.msra.mxu0 0
    %458 = vmatprep.subr.bf16.mxu0 0
    %459 = vmatpush1.bf16.msra.mxu0 0
    %460 = vmatprep.subr.bf16.mxu0 0
    %461 = vmatpush1.bf16.msra.mxu0 0
    %462 = vmatprep.subr.bf16.mxu0 0
    %463 = vmatpush1.bf16.msra.mxu0 0
    %464 = vmatprep.mubr.bf16.mxu0 0
    %465 = vmatmul.mubr.bf16.gmra.mrb[0].mxu0 %v430
    %v466 = vpop.f32.mrb[0].mxu0
    %v467 = vadd.f32 %v421, %v466
    %v468 = vpop.f32.mrb[0].mxu0
    %v469 = vpop.f32.mrb[0].mxu0
    %v470 = vpop.f32.mrb[0].mxu0
    %471 = vdwg.mxu0
    %vm472 = vcmp.ne.f32.partialorder %v285, %v285
    %v473 = vsel %vm472, 0.0, %v285
    %v474 = vmax.f32 %v473, -3.4028235e+38
    %v475 = vmin.f32 %v474, 3.4028235e+38
    %vm476 = vcmask 254976
    %477 = vst.msk [vmem:[#allocation16] sm:$0x3] %vm476, %v475
    %vm478 = vcmp.ne.f32.partialorder %v346, %v346
    %v479 = vsel %vm478, 0.0, %v346
    %v480 = vmax.f32 %v479, -3.4028235e+38
    %v481 = vmin.f32 %v480, 3.4028235e+38
    %s482 = scalar_lea.vmem [#allocation16], 2
    %483 = vst.msk [vmem:[%s482] sm:$0x3] %vm476, %v481
    %vm484 = vcmp.ne.f32.partialorder %v351, %v351
    %v485 = vsel %vm484, 0.0, %v351
    %v486 = vmax.f32 %v485, -3.4028235e+38
    %v487 = vmin.f32 %v486, 3.4028235e+38
    %s488 = scalar_lea.vmem [#allocation16], 4
    %489 = vst.msk [vmem:[%s488] sm:$0x3] %vm476, %v487
    %vm490 = vcmp.ne.f32.partialorder %v407, %v407
    %v491 = vsel %vm490, 0.0, %v407
    %v492 = vmax.f32 %v491, -3.4028235e+38
    %v493 = vmin.f32 %v492, 3.4028235e+38
    %s494 = scalar_lea.vmem [#allocation16], 6
    %495 = vst.msk [vmem:[%s494] sm:$0x3] %vm476, %v493
    %vm496 = vcmp.ne.f32.partialorder %v467, %v467
    %v497 = vsel %vm496, 0.0, %v467
    %v498 = vmax.f32 %v497, -3.4028235e+38
    %v499 = vmin.f32 %v498, 3.4028235e+38
    %s500 = scalar_lea.vmem [#allocation16], 8
    %501 = vst.msk [vmem:[%s500] sm:$0x3] %vm476, %v499
    // Predicated region
    $region94: #{tpu_custom_call.1} parent=1 // pred_check
      _
    $region95: #{tpu_custom_call.1} parent=1 // pred_check_branch
      %503 = sbr.rel (0) target = $region97
    $region96: #{tpu_custom_call.1} parent=1 // pred_region
      %s505 = ssub.s32 160, 160
      %506 = vsyncadd [#allocation4], %s505
      %s507 = sshll.u32 [#allocation16], 4
      %s508 = int_to_ptr.vmem [resolvable:$true] %s507
      %513 = dma.vmem_to_hbm [thread:$0]  %s508, 160, %s15, [#allocation4], 32, 32, 2
    $region97: #{tpu_custom_call.1} parent=1 // pred_fallthru
      _
    // Predicated region
    $region98: #{tpu_custom_call.1} parent=1 // pred_check
      _
    $region99: #{tpu_custom_call.1} parent=1 // pred_check_branch
      %515 = sbr.rel (0) target = $region101
    $region100: #{tpu_custom_call.1} parent=1 // pred_region
      %516 = dma.done [#allocation4], 160
    $region101: #{tpu_custom_call.1} parent=1 // pred_fallthru
      _
    %517 = vsyncpa [#allocation3], 1
    %518 = vsyncpa [#allocation6], 1
    %519 = vsyncpa [#allocation9], 1
    %520 = vsyncpa [#allocation12], 1
    %521 = vsyncpa [#allocation15], 1
    %522 = vsyncpa [#allocation4], 1

</llo_original>
